<compile_context>
chip_gen: v5e
topology: v5e:2x2
jax: 0.10.0
libtpu: 0.0.40
codegen_flags: <defaults>
</compile_context>

<pallas_src>
import functools

import jax
import jax.numpy as jnp
from jax.experimental import pallas as pl
from jax.experimental.pallas import tpu as pltpu

_LANES = 128
_ACC_ROWS = 32                       # accumulator height: 4 f32 vregs
_CHUNK_ROWS = 512                    # rows per inner step (bounds VMEM temps)
_BLOCK_BYTES = 4 * 1024 * 1024       # target HBM block size per input per step
_VMEM_LIMIT_BYTES = 48 * 1024 * 1024


def _pointwise_distance(d, mode):
    if mode == "l2":
        return d * d
    if mode == "l1":
        return jnp.abs(d)
    # smooth_l1, beta = 1.0 (PyTorch default)
    ad = jnp.abs(d)
    return jnp.where(ad < 1.0, 0.5 * d * d, ad - 0.5)


def _distance_sum_kernel(x_ref, y_ref, o_ref, acc_ref, *, mode, rows, block_r,
                         n_chunks, emit_mask):
    i = pl.program_id(1)

    @pl.when(i == 0)
    def _():
        acc_ref[...] = jnp.zeros_like(acc_ref)

    global_block = pl.program_id(0) * n_chunks + i
    block_row0 = global_block * block_r

    @pl.loop(0, block_r // _CHUNK_ROWS)
    def _(j):
        r0 = pl.multiple_of(j * _CHUNK_ROWS, _CHUNK_ROWS)
        d = (x_ref[pl.ds(r0, _CHUNK_ROWS), :].astype(jnp.float32)
             - y_ref[pl.ds(r0, _CHUNK_ROWS), :].astype(jnp.float32))
        pe = _pointwise_distance(d, mode)

        def acc_into(vals):
            # (512,128) -> (16,32,128) -> sum over 16: pure VPU adds into a
            # 4-vreg accumulator (no cross-lane work, no serial scalar chain).
            acc_ref[...] += vals.reshape(
                _CHUNK_ROWS // _ACC_ROWS, _ACC_ROWS, _LANES).sum(axis=0)

        if emit_mask:
            gr0 = block_row0 + j * _CHUNK_ROWS   # global row of chunk start

            @pl.when(gr0 + _CHUNK_ROWS <= rows)  # fully valid chunk (common)
            def _():
                acc_into(pe)

            @pl.when(gr0 + _CHUNK_ROWS > rows)   # tail / overhang chunk only
            def _():
                row_ids = gr0 + jax.lax.broadcasted_iota(
                    jnp.int32, (_CHUNK_ROWS, _LANES), 0)
                acc_into(jnp.where(row_ids < rows, pe, 0.0))
        else:
            acc_into(pe)

    @pl.when(i == pl.num_programs(1) - 1)
    def _():
        o_ref[0] = acc_ref[...]


def _round_up(v, m):
    return ((v + m - 1) // m) * m


def _num_parallel_slices():
    # The leading "parallel" grid axis only pays off on multi-TensorCore chips
    # (v7x).  On single-TC v5e/v6e it would just be a serial outer loop.
    try:
        kind = jax.devices()[0].device_kind.lower()
    except Exception:
        return 1
    return 2 if "v7" in kind else 1


def _vmem_limit_bytes():
    limit = _VMEM_LIMIT_BYTES
    try:
        # Stay well under physical VMEM (64 MiB/TC on v7x, 128 MiB on v5e/v6e).
        cap = int(pltpu.get_tpu_info().vmem_capacity_bytes)
        limit = min(limit, (cap * 3) // 4)
    except Exception:
        pass
    return limit


def _distance_sum_2d(x2, y2, mode):
    """Sum of pointwise distances over a lane-dense (rows, 128) slab."""
    rows = x2.shape[0]
    itemsize = max(jnp.dtype(x2.dtype).itemsize, jnp.dtype(y2.dtype).itemsize)

    # dtype-aware block size: ~4 MiB of HBM per input per grid step, rounded to
    # the inner-chunk granularity (bf16 automatically gets 2x the rows).
    cap_rows = max(_CHUNK_ROWS,
                   (_BLOCK_BYTES // (_LANES * itemsize))
                   // _CHUNK_ROWS * _CHUNK_ROWS)
    block_r = min(cap_rows, _round_up(rows, _CHUNK_ROWS))

    num_blocks = pl.cdiv(rows, block_r)
    num_slices = min(_num_parallel_slices(), num_blocks)
    n_chunks = pl.cdiv(num_blocks, num_slices)
    total_grid_blocks = num_slices * n_chunks

    # Mask branch is only emitted when some chunk can contain invalid rows
    # (partial tail block, or 2-slice overhang on v7x with an odd block count).
    emit_mask = (rows % block_r != 0) or (total_grid_blocks != num_blocks)

    if total_grid_blocks == num_blocks:
        in_map = lambda c, i: (c * n_chunks + i, 0)
    else:
        # Clamp over-hanging block indices so no out-of-range DMA is issued;
        # their contribution is fully masked in-kernel.
        in_map = lambda c, i: (jnp.minimum(c * n_chunks + i, num_blocks - 1), 0)

    kernel = functools.partial(
        _distance_sum_kernel, mode=mode, rows=rows, block_r=block_r,
        n_chunks=n_chunks, emit_mask=emit_mask)

    flops_per_elem = 7 if mode == "smooth_l1" else 3
    cost = pl.CostEstimate(
        flops=flops_per_elem * rows * _LANES,
        transcendentals=0,
        bytes_accessed=(rows * _LANES * (jnp.dtype(x2.dtype).itemsize
                                         + jnp.dtype(y2.dtype).itemsize)
                        + num_slices * _ACC_ROWS * _LANES * 4))

    partial_sums = pl.pallas_call(
        kernel,
        out_shape=jax.ShapeDtypeStruct((num_slices, _ACC_ROWS, _LANES),
                                       jnp.float32),
        grid_spec=pltpu.PrefetchScalarGridSpec(
            num_scalar_prefetch=0,
            grid=(num_slices, n_chunks),
            in_specs=[
                pl.BlockSpec((block_r, _LANES), in_map),
                pl.BlockSpec((block_r, _LANES), in_map),
            ],
            out_specs=pl.BlockSpec((1, _ACC_ROWS, _LANES),
                                   lambda c, i: (c, 0, 0)),
            scratch_shapes=[pltpu.VMEM((_ACC_ROWS, _LANES), jnp.float32)],
        ),
        compiler_params=pltpu.CompilerParams(
            dimension_semantics=("parallel", "arbitrary"),
            vmem_limit_bytes=_vmem_limit_bytes()),
        cost_estimate=cost,
    )(x2, y2)

    # Single cross-lane/sublane collapse.
    return jnp.sum(partial_sums)


@functools.partial(jax.jit, static_argnames=("mode",))
def distance_loss(x, y, mode: str = "l2"):
    """Pallas-TPU equivalent of DistanceLoss(mode).forward(x, y) ('mean')."""
    assert mode in ("l1", "l2", "smooth_l1")
    assert x.shape == y.shape
    n = x.size

    xf = x.reshape(-1)
    yf = y.reshape(-1)

    remainder = n % _LANES
    aligned = n - remainder

    total = jnp.float32(0.0)
    if aligned:
        rows = aligned // _LANES
        if remainder:
            # Ragged size: kernel runs on the 128-aligned prefix (no whole-array
            # jnp.pad copy).
            # TODO(synk): the prefix slice may still materialize a copy; a fully
            # copy-free ragged path would need a 1-D manual-DMA kernel.
            x_pref, y_pref = xf[:aligned], yf[:aligned]
        else:
            x_pref, y_pref = xf, yf            # free reshape, zero copies
        total = total + _distance_sum_2d(x_pref.reshape(rows, _LANES),
                                         y_pref.reshape(rows, _LANES), mode)
    if remainder:
        dt = xf[aligned:].astype(jnp.float32) - yf[aligned:].astype(jnp.float32)
        total = total + jnp.sum(_pointwise_distance(dt, mode))

    # Mean reduction (PyTorch default). Result kept in f32 for accuracy.
    return total / jnp.float32(n)


if __name__ == "__main__":
    key = jax.random.PRNGKey(0)
    kx, ky, kx2, ky2 = jax.random.split(key, 4)

    def ref_loss(a, b, mode):
        d = a.astype(jnp.float32) - b.astype(jnp.float32)
        if mode == "l2":
            return jnp.mean(d * d)
        if mode == "l1":
            return jnp.mean(jnp.abs(d))
        ad = jnp.abs(d)
        return jnp.mean(jnp.where(ad < 1.0, 0.5 * d * d, ad - 0.5))

    # Primary small case: NCHW feature maps as the distillation loss receives.
    x = jax.random.normal(kx, (2, 4, 16, 16), dtype=jnp.float32)
    y = jax.random.normal(ky, (2, 4, 16, 16), dtype=jnp.float32)
    for mode in ("l2", "l1", "smooth_l1"):
        out = jax.block_until_ready(distance_loss(x, y, mode=mode))
        ref = ref_loss(x, y, mode)
        assert jnp.allclose(out, ref, rtol=1e-5, atol=1e-6), (mode, out, ref)

    # Multi-block path with a partial tail block (exercises the masked branch
    # and the large streaming-block path).
    xb = jax.random.normal(kx2, (72, 125, 128), dtype=jnp.float32)
    yb = jax.random.normal(ky2, (72, 125, 128), dtype=jnp.float32)
    out_b = jax.block_until_ready(distance_loss(xb, yb, mode="l2"))
    ref_b = ref_loss(xb, yb, "l2")
    assert jnp.allclose(out_b, ref_b, rtol=5e-5, atol=1e-6), (out_b, ref_b)

    # Ragged size (n % 128 != 0): aligned prefix via the kernel + jnp tail.
    xr = jax.random.normal(kx, (3, 5, 7, 11), dtype=jnp.float32)
    yr = jax.random.normal(ky, (3, 5, 7, 11), dtype=jnp.float32)
    out_r = jax.block_until_ready(distance_loss(xr, yr, mode="l1"))
    ref_r = ref_loss(xr, yr, "l1")
    assert jnp.allclose(out_r, ref_r, rtol=1e-5, atol=1e-6), (out_r, ref_r)

    # bf16 inputs: native-dtype streaming, per-chunk cast to f32 in-kernel.
    xh = jax.random.normal(kx2, (2, 4, 16, 16), dtype=jnp.bfloat16)
    yh = jax.random.normal(ky2, (2, 4, 16, 16), dtype=jnp.bfloat16)
    out_h = jax.block_until_ready(distance_loss(xh, yh, mode="smooth_l1"))
    ref_h = ref_loss(xh, yh, "smooth_l1")
    assert jnp.allclose(out_h, ref_h, rtol=1e-5, atol=1e-6), (out_h, ref_h)

    print("KERNEL_OK")
</pallas_src>

<mosaic_0001>
module attributes {stable_mosaic.version = 11 : i64} {
  func.func @_distance_sum_kernel(%arg0: i32, %arg1: i32, %arg2: memref<512x128xf32, #tpu.memory_space<vmem>>, %arg3: memref<512x128xf32, #tpu.memory_space<vmem>>, %arg4: memref<1x32x128xf32, #tpu.memory_space<vmem>>, %arg5: memref<32x128xf32, #tpu.memory_space<vmem>>) attributes {dimension_semantics = [#tpu.dimension_semantics<parallel>, #tpu.dimension_semantics<arbitrary>], iteration_bounds = array<i64: 1, 1>, scalar_prefetch = 0 : i64, scratch_operands = 1 : i64, tpu.core_type = #tpu.core_type<tc>, window_params = [{transform_indices = @transform_0, window_bounds = array<i64: 512, 128>}, {transform_indices = @transform_1, window_bounds = array<i64: 512, 128>}, {transform_indices = @transform_2, window_bounds = array<i64: 1, 32, 128>}]} {
    %c0_i32 = arith.constant 0 : i32
    %0 = arith.cmpi eq, %arg1, %c0_i32 : i32
    %1 = arith.extui %0 : i1 to i32
    %c0_i32_0 = arith.constant 0 : i32
    %2 = arith.cmpi ne, %1, %c0_i32_0 : i32
    scf.if %2 {
      %cst = arith.constant 0.000000e+00 : f32
      %29 = vector.broadcast %cst : f32 to vector<32x128xf32>
      %c0_15 = arith.constant 0 : index
      %c0_16 = arith.constant 0 : index
      %30 = vector.load %arg5[%c0_15, %c0_16] : memref<32x128xf32, #tpu.memory_space<vmem>>, vector<32x128xf32>
      tpu.vector_store %arg5[%c0_15, %c0_16], %29 {strides = array<i32>} : memref<32x128xf32, #tpu.memory_space<vmem>>, vector<32x128xf32>,
    } else {
    }
    %c1_i32 = arith.constant 1 : i32
    %3 = arith.muli %arg0, %c1_i32 : i32
    %4 = arith.addi %3, %arg1 : i32
    %c512_i32 = arith.constant 512 : i32
    %5 = arith.muli %4, %c512_i32 : i32
    %c0_i32_1 = arith.constant 0 : i32
    %c1_i32_2 = arith.constant 1 : i32
    %6 = arith.muli %c0_i32_1, %c1_i32_2 : i32
    %c0_i32_3 = arith.constant 0 : i32
    %7 = arith.addi %c0_i32_3, %6 : i32
    %c512_i32_4 = arith.constant 512 : i32
    %8 = arith.muli %7, %c512_i32_4 : i32
    %9 = tpu.assume_multiple %8, 512 : i32
    %10 = arith.index_cast %9 : i32 to index
    %c0 = arith.constant 0 : index
    %11 = vector.load %arg2[%10, %c0] : memref<512x128xf32, #tpu.memory_space<vmem>>, vector<512x128xf32>
    %12 = arith.index_cast %9 : i32 to index
    %c0_5 = arith.constant 0 : index
    %13 = vector.load %arg3[%12, %c0_5] : memref<512x128xf32, #tpu.memory_space<vmem>>, vector<512x128xf32>
    %14 = arith.subf %11, %13 : vector<512x128xf32>
    %15 = arith.mulf %14, %14 : vector<512x128xf32>
    %c512_i32_6 = arith.constant 512 : i32
    %16 = arith.muli %7, %c512_i32_6 : i32
    %17 = arith.addi %5, %16 : i32
    %c512_i32_7 = arith.constant 512 : i32
    %18 = arith.addi %17, %c512_i32_7 : i32
    %c16_i32 = arith.constant 16 : i32
    %19 = arith.cmpi sle, %18, %c16_i32 : i32
    %20 = arith.extui %19 : i1 to i32
    %c0_i32_8 = arith.constant 0 : i32
    %21 = arith.cmpi ne, %20, %c0_i32_8 : i32
    scf.if %21 {
      %c0_15 = arith.constant 0 : index
      %c0_16 = arith.constant 0 : index
      %29 = vector.load %arg5[%c0_15, %c0_16] : memref<32x128xf32, #tpu.memory_space<vmem>>, vector<32x128xf32>
      %30 = vector.shape_cast %15 : vector<512x128xf32> to vector<16x32x128xf32>
      %cst = arith.constant dense<0.000000e+00> : vector<32x128xf32>
      %31 = vector.multi_reduction <add>, %30, %cst [0] : vector<16x32x128xf32> to vector<32x128xf32>
      %32 = arith.addf %29, %31 : vector<32x128xf32>
      %c0_17 = arith.constant 0 : index
      %c0_18 = arith.constant 0 : index
      %33 = vector.load %arg5[%c0_17, %c0_18] : memref<32x128xf32, #tpu.memory_space<vmem>>, vector<32x128xf32>
      tpu.vector_store %arg5[%c0_17, %c0_18], %32 {strides = array<i32>} : memref<32x128xf32, #tpu.memory_space<vmem>>, vector<32x128xf32>,
    } else {
    }
    %c512_i32_9 = arith.constant 512 : i32
    %22 = arith.addi %17, %c512_i32_9 : i32
    %c16_i32_10 = arith.constant 16 : i32
    %23 = arith.cmpi sgt, %22, %c16_i32_10 : i32
    %24 = arith.extui %23 : i1 to i32
    %c0_i32_11 = arith.constant 0 : i32
    %25 = arith.cmpi ne, %24, %c0_i32_11 : i32
    scf.if %25 {
      %29 = tpu.iota {dimensions = array<i32: 0>} : vector<512x128xi32>
      %30 = vector.broadcast %17 : i32 to vector<512x128xi32>
      %31 = arith.addi %30, %29 : vector<512x128xi32>
      %c16_i32_15 = arith.constant 16 : i32
      %32 = vector.broadcast %c16_i32_15 : i32 to vector<512x128xi32>
      %33 = arith.cmpi slt, %31, %32 : vector<512x128xi32>
      %cst = arith.constant 0.000000e+00 : f32
      %34 = vector.broadcast %cst : f32 to vector<512x128xf32>
      %35 = arith.select %33, %15, %34 : vector<512x128xi1>, vector<512x128xf32>
      %c0_16 = arith.constant 0 : index
      %c0_17 = arith.constant 0 : index
      %36 = vector.load %arg5[%c0_16, %c0_17] : memref<32x128xf32, #tpu.memory_space<vmem>>, vector<32x128xf32>
      %37 = vector.shape_cast %35 : vector<512x128xf32> to vector<16x32x128xf32>
      %cst_18 = arith.constant dense<0.000000e+00> : vector<32x128xf32>
      %38 = vector.multi_reduction <add>, %37, %cst_18 [0] : vector<16x32x128xf32> to vector<32x128xf32>
      %39 = arith.addf %36, %38 : vector<32x128xf32>
      %c0_19 = arith.constant 0 : index
      %c0_20 = arith.constant 0 : index
      %40 = vector.load %arg5[%c0_19, %c0_20] : memref<32x128xf32, #tpu.memory_space<vmem>>, vector<32x128xf32>
      tpu.vector_store %arg5[%c0_19, %c0_20], %39 {strides = array<i32>} : memref<32x128xf32, #tpu.memory_space<vmem>>, vector<32x128xf32>,
    } else {
    }
    %c1_i32_12 = arith.constant 1 : i32
    %c0_i32_13 = arith.constant 0 : i32
    %26 = arith.cmpi eq, %arg1, %c0_i32_13 : i32
    %27 = arith.extui %26 : i1 to i32
    %c0_i32_14 = arith.constant 0 : i32
    %28 = arith.cmpi ne, %27, %c0_i32_14 : i32
    scf.if %28 {
      %c0_15 = arith.constant 0 : index
      %c0_16 = arith.constant 0 : index
      %29 = vector.load %arg5[%c0_15, %c0_16] : memref<32x128xf32, #tpu.memory_space<vmem>>, vector<32x128xf32>
      %c0_17 = arith.constant 0 : index
      %c0_18 = arith.constant 0 : index
      %c0_19 = arith.constant 0 : index
      %30 = vector.load %arg4[%c0_17, %c0_18, %c0_19] : memref<1x32x128xf32, #tpu.memory_space<vmem>>, vector<1x32x128xf32>
      %31 = vector.shape_cast %30 : vector<1x32x128xf32> to vector<32x128xf32>
      %32 = vector.shape_cast %29 : vector<32x128xf32> to vector<1x32x128xf32>
      tpu.vector_store %arg4[%c0_17, %c0_18, %c0_19], %32 {strides = array<i32>} : memref<1x32x128xf32, #tpu.memory_space<vmem>>, vector<1x32x128xf32>,
    } else {
    }
    return
  }
  func.func @transform_0(%arg0: i32, %arg1: i32) -> (i32, i32) {
    %c1_i32 = arith.constant 1 : i32
    %0 = arith.muli %arg0, %c1_i32 : i32
    %1 = arith.addi %0, %arg1 : i32
    %c0_i32 = arith.constant 0 : i32
    %c0_i32_0 = arith.constant 0 : i32
    return %1, %c0_i32 : i32, i32
  }
  func.func @transform_1(%arg0: i32, %arg1: i32) -> (i32, i32) {
    %c1_i32 = arith.constant 1 : i32
    %0 = arith.muli %arg0, %c1_i32 : i32
    %1 = arith.addi %0, %arg1 : i32
    %c0_i32 = arith.constant 0 : i32
    %c0_i32_0 = arith.constant 0 : i32
    return %1, %c0_i32 : i32, i32
  }
  func.func @transform_2(%arg0: i32, %arg1: i32) -> (i32, i32, i32) {
    %c0_i32 = arith.constant 0 : i32
    %c0_i32_0 = arith.constant 0 : i32
    %c0_i32_1 = arith.constant 0 : i32
    return %arg0, %c0_i32, %c0_i32_0 : i32, i32, i32
  }
}

</mosaic_0001>

<llo_original>
// kernel: distance_loss.1
$region0: #{distance_loss.1}
  #allocation0 [shape = 'u32[]', space=smem, size = 0x4, offset = 0x4, fixed_abs, tag = 'smem constant byte address 0x4 - core index']
  #allocation1 [shape = 'u32[72,128]{1,0:T(1,128)}', space=vmem, size = 0x9000, scoped, tag = 'internal scratch']
  #allocation2 [shape = 'f32[32,128]{1,0:T(8,128)}', space=vmem, size = 0x4000, scoped, tag = 'scratch operand']
  %s0 = inlined_call_operand.vmem [shape: f32[16,128], index: 0, kind: input, shape index: {}]
  %s1 = inlined_call_operand.vmem [shape: f32[16,128], index: 1, kind: input, shape index: {}]
  %s2 = inlined_call_operand.vmem [shape: f32[1,32,128], index: 2, kind: output, shape index: {}]
  %s3 = sld [smem:[#allocation0]]
  $region34: #{distance_loss.1} parent=0
    _
  %s5 = ssub.s32 1, %s3
  %s6 = scalar_select 0, %s5, %s3
  // Predicated region
  $region2: #{distance_loss.1} parent=0 // pred_check
    _
  $region3: #{distance_loss.1} parent=0 // pred_check_branch
    %8 = sbr.rel (0) target = $region5
  $region4: #{distance_loss.1} parent=0 // pred_region
    %s9 = sadd.s32 0, 0
    %s10 = smul.u32 64, %s9
    %s11 = ssub.s32 2, %s10
    %s12 = smul.u32 8, %s11
    %p13 = scmp.lt.s32.totalorder %s10, 1
    %s14 = scalar_select %p13, %s10, 1
    %s15 = smul.addr %s14, 8
    %s16 = scalar_lea.vmem %s0, %s15
    %s17 = sadd.s32 0, 0
    %s18 = smul.u32 64, %s17
    %s19 = ssub.s32 2, %s18
    %s20 = smul.u32 8, %s19
  $region5: #{distance_loss.1} parent=0 // pred_fallthru
    _
  // Predicated region
  $region6: #{distance_loss.1} parent=0 // pred_check
    _
  $region7: #{distance_loss.1} parent=0 // pred_check_branch
    %22 = sbr.rel (0) target = $region9
  $region8: #{distance_loss.1} parent=0 // pred_region
    %s23 = sadd.s32 0, 0
    %s24 = smul.u32 64, %s23
    %s25 = ssub.s32 2, %s24
    %s26 = smul.u32 8, %s25
    %p27 = scmp.lt.s32.totalorder %s24, 1
    %s28 = scalar_select %p27, %s24, 1
    %s29 = smul.addr %s28, 8
    %s30 = scalar_lea.vmem %s1, %s29
    %s31 = sadd.s32 0, 0
    %s32 = smul.u32 64, %s31
    %s33 = ssub.s32 2, %s32
    %s34 = smul.u32 8, %s33
  $region9: #{distance_loss.1} parent=0 // pred_fallthru
    _
  %s35 = sadd.s32 0, 0
  %s36 = smul.u32 64, %s35
  %s37 = ssub.s32 2, %s36
  %s38 = smul.u32 8, %s37
  %p39 = scmp.lt.s32.totalorder %s36, 1
  %s40 = scalar_select %p39, %s36, 1
  %s41 = smul.addr %s40, 8
  %s42 = scalar_lea.vmem %s0, %s41
  %s43 = sadd.s32 0, 0
  %s44 = smul.u32 64, %s43
  %s45 = ssub.s32 2, %s44
  %s46 = smul.u32 8, %s45
  %p47 = scmp.lt.s32.totalorder %s44, 1
  %s48 = scalar_select %p47, %s44, 1
  %s49 = smul.addr %s48, 8
  %s50 = scalar_lea.vmem %s1, %s49
  %s51 = sadd.s32 0, 0
  %s52 = smul.u32 64, %s51
  %s53 = ssub.s32 2, %s52
  %s54 = smul.u32 8, %s53
  %p55 = scmp.lt.s32.totalorder %s52, 1
  %s56 = scalar_select %p55, %s52, 1
  %s57 = smul.addr %s56, 8
  %s58 = scalar_lea.vmem %s0, %s57
  %s59 = sadd.s32 0, 0
  %s60 = smul.u32 64, %s59
  %s61 = ssub.s32 2, %s60
  %s62 = smul.u32 8, %s61
  %s63 = sadd.s32 0, 0
  %s64 = smul.u32 64, %s63
  %s65 = ssub.s32 2, %s64
  %s66 = smul.u32 8, %s65
  %p67 = scmp.lt.s32.totalorder %s64, 1
  %s68 = scalar_select %p67, %s64, 1
  %s69 = smul.addr %s68, 8
  %s70 = scalar_lea.vmem %s1, %s69
  %s71 = sadd.s32 0, 0
  %s72 = smul.u32 64, %s71
  %s73 = ssub.s32 2, %s72
  %s74 = smul.u32 8, %s73
  %p75 = scmp.eq.s32.totalorder 0, 0
  // Predicated region
  $region10: #{distance_loss.1} parent=0 // pred_check
    %p76 = pneg %p75
  $region11: #{distance_loss.1} parent=0 // pred_check_branch
    %78 = sbr.rel (%p76) target = $region13
  $region12: #{distance_loss.1} parent=0 // pred_region
    %79 = vst [vmem:[#allocation2] sm:$0xff] 0.0
    %80 = vst [vmem:[#allocation2 + $0x8] sm:$0xff] 0.0
    %81 = vst [vmem:[#allocation2 + $0x10] sm:$0xff] 0.0
    %82 = vst [vmem:[#allocation2 + $0x18] sm:$0xff] 0.0
  $region13: #{distance_loss.1} parent=0 // pred_fallthru
    _
  %s83 = sadd.s32 0, 0
  %s84 = smul.u32 %s83, 512
  %v85 = vld [vmem:[%s58] sm:$0xff]
  %v86 = vld [vmem:[%s58 + $0x8] sm:$0xff]
  %v87 = vld [vmem:[%s58 + $0x10] sm:$0xff]
  %v88 = vld [vmem:[%s58 + $0x18] sm:$0xff]
  %v89 = vld [vmem:[%s58 + $0x20] sm:$0xff]
  %v90 = vld [vmem:[%s58 + $0x28] sm:$0xff]
  %v91 = vld [vmem:[%s58 + $0x30] sm:$0xff]
  %v92 = vld [vmem:[%s58 + $0x38] sm:$0xff]
  %v93 = vld [vmem:[%s58 + $0x40] sm:$0xff]
  %v94 = vld [vmem:[%s58 + $0x48] sm:$0xff]
  %v95 = vld [vmem:[%s58 + $0x50] sm:$0xff]
  %v96 = vld [vmem:[%s58 + $0x58] sm:$0xff]
  %v97 = vld [vmem:[%s58 + $0x60] sm:$0xff]
  %v98 = vld [vmem:[%s58 + $0x68] sm:$0xff]
  %v99 = vld [vmem:[%s58 + $0x70] sm:$0xff]
  %v100 = vld [vmem:[%s58 + $0x78] sm:$0xff]
  %v101 = vld [vmem:[%s58 + $0x80] sm:$0xff]
  %v102 = vld [vmem:[%s58 + $0x88] sm:$0xff]
  %v103 = vld [vmem:[%s58 + $0x90] sm:$0xff]
  %v104 = vld [vmem:[%s58 + $0x98] sm:$0xff]
  %v105 = vld [vmem:[%s58 + $0xa0] sm:$0xff]
  %v106 = vld [vmem:[%s58 + $0xa8] sm:$0xff]
  %v107 = vld [vmem:[%s58 + $0xb0] sm:$0xff]
  %v108 = vld [vmem:[%s58 + $0xb8] sm:$0xff]
  %v109 = vld [vmem:[%s58 + $0xc0] sm:$0xff]
  %v110 = vld [vmem:[%s58 + $0xc8] sm:$0xff]
  %v111 = vld [vmem:[%s58 + $0xd0] sm:$0xff]
  %v112 = vld [vmem:[%s58 + $0xd8] sm:$0xff]
  %v113 = vld [vmem:[%s58 + $0xe0] sm:$0xff]
  %v114 = vld [vmem:[%s58 + $0xe8] sm:$0xff]
  %v115 = vld [vmem:[%s58 + $0xf0] sm:$0xff]
  %v116 = vld [vmem:[%s58 + $0xf8] sm:$0xff]
  %v117 = vld [vmem:[%s58 + $0x100] sm:$0xff]
  %v118 = vld [vmem:[%s58 + $0x108] sm:$0xff]
  %v119 = vld [vmem:[%s58 + $0x110] sm:$0xff]
  %v120 = vld [vmem:[%s58 + $0x118] sm:$0xff]
  %v121 = vld [vmem:[%s58 + $0x120] sm:$0xff]
  %v122 = vld [vmem:[%s58 + $0x128] sm:$0xff]
  %v123 = vld [vmem:[%s58 + $0x130] sm:$0xff]
  %v124 = vld [vmem:[%s58 + $0x138] sm:$0xff]
  %v125 = vld [vmem:[%s58 + $0x140] sm:$0xff]
  %v126 = vld [vmem:[%s58 + $0x148] sm:$0xff]
  %v127 = vld [vmem:[%s58 + $0x150] sm:$0xff]
  %v128 = vld [vmem:[%s58 + $0x158] sm:$0xff]
  %v129 = vld [vmem:[%s58 + $0x160] sm:$0xff]
  %v130 = vld [vmem:[%s58 + $0x168] sm:$0xff]
  %v131 = vld [vmem:[%s58 + $0x170] sm:$0xff]
  %v132 = vld [vmem:[%s58 + $0x178] sm:$0xff]
  %v133 = vld [vmem:[%s58 + $0x180] sm:$0xff]
  %v134 = vld [vmem:[%s58 + $0x188] sm:$0xff]
  %v135 = vld [vmem:[%s58 + $0x190] sm:$0xff]
  %v136 = vld [vmem:[%s58 + $0x198] sm:$0xff]
  %v137 = vld [vmem:[%s58 + $0x1a0] sm:$0xff]
  %v138 = vld [vmem:[%s58 + $0x1a8] sm:$0xff]
  %v139 = vld [vmem:[%s58 + $0x1b0] sm:$0xff]
  %v140 = vld [vmem:[%s58 + $0x1b8] sm:$0xff]
  %v141 = vld [vmem:[%s58 + $0x1c0] sm:$0xff]
  %v142 = vld [vmem:[%s58 + $0x1c8] sm:$0xff]
  %v143 = vld [vmem:[%s58 + $0x1d0] sm:$0xff]
  %v144 = vld [vmem:[%s58 + $0x1d8] sm:$0xff]
  %v145 = vld [vmem:[%s58 + $0x1e0] sm:$0xff]
  %v146 = vld [vmem:[%s58 + $0x1e8] sm:$0xff]
  %v147 = vld [vmem:[%s58 + $0x1f0] sm:$0xff]
  %v148 = vld [vmem:[%s58 + $0x1f8] sm:$0xff]
  %v149 = vld [vmem:[%s70] sm:$0xff]
  %v150 = vld [vmem:[%s70 + $0x8] sm:$0xff]
  %v151 = vld [vmem:[%s70 + $0x10] sm:$0xff]
  %v152 = vld [vmem:[%s70 + $0x18] sm:$0xff]
  %v153 = vld [vmem:[%s70 + $0x20] sm:$0xff]
  %v154 = vld [vmem:[%s70 + $0x28] sm:$0xff]
  %v155 = vld [vmem:[%s70 + $0x30] sm:$0xff]
  %v156 = vld [vmem:[%s70 + $0x38] sm:$0xff]
  %v157 = vld [vmem:[%s70 + $0x40] sm:$0xff]
  %v158 = vld [vmem:[%s70 + $0x48] sm:$0xff]
  %v159 = vld [vmem:[%s70 + $0x50] sm:$0xff]
  %v160 = vld [vmem:[%s70 + $0x58] sm:$0xff]
  %v161 = vld [vmem:[%s70 + $0x60] sm:$0xff]
  %v162 = vld [vmem:[%s70 + $0x68] sm:$0xff]
  %v163 = vld [vmem:[%s70 + $0x70] sm:$0xff]
  %v164 = vld [vmem:[%s70 + $0x78] sm:$0xff]
  %v165 = vld [vmem:[%s70 + $0x80] sm:$0xff]
  %v166 = vld [vmem:[%s70 + $0x88] sm:$0xff]
  %v167 = vld [vmem:[%s70 + $0x90] sm:$0xff]
  %v168 = vld [vmem:[%s70 + $0x98] sm:$0xff]
  %v169 = vld [vmem:[%s70 + $0xa0] sm:$0xff]
  %v170 = vld [vmem:[%s70 + $0xa8] sm:$0xff]
  %v171 = vld [vmem:[%s70 + $0xb0] sm:$0xff]
  %v172 = vld [vmem:[%s70 + $0xb8] sm:$0xff]
  %v173 = vld [vmem:[%s70 + $0xc0] sm:$0xff]
  %v174 = vld [vmem:[%s70 + $0xc8] sm:$0xff]
  %v175 = vld [vmem:[%s70 + $0xd0] sm:$0xff]
  %v176 = vld [vmem:[%s70 + $0xd8] sm:$0xff]
  %v177 = vld [vmem:[%s70 + $0xe0] sm:$0xff]
  %v178 = vld [vmem:[%s70 + $0xe8] sm:$0xff]
  %v179 = vld [vmem:[%s70 + $0xf0] sm:$0xff]
  %v180 = vld [vmem:[%s70 + $0xf8] sm:$0xff]
  %v181 = vld [vmem:[%s70 + $0x100] sm:$0xff]
  %v182 = vld [vmem:[%s70 + $0x108] sm:$0xff]
  %v183 = vld [vmem:[%s70 + $0x110] sm:$0xff]
  %v184 = vld [vmem:[%s70 + $0x118] sm:$0xff]
  %v185 = vld [vmem:[%s70 + $0x120] sm:$0xff]
  %v186 = vld [vmem:[%s70 + $0x128] sm:$0xff]
  %v187 = vld [vmem:[%s70 + $0x130] sm:$0xff]
  %v188 = vld [vmem:[%s70 + $0x138] sm:$0xff]
  %v189 = vld [vmem:[%s70 + $0x140] sm:$0xff]
  %v190 = vld [vmem:[%s70 + $0x148] sm:$0xff]
  %v191 = vld [vmem:[%s70 + $0x150] sm:$0xff]
  %v192 = vld [vmem:[%s70 + $0x158] sm:$0xff]
  %v193 = vld [vmem:[%s70 + $0x160] sm:$0xff]
  %v194 = vld [vmem:[%s70 + $0x168] sm:$0xff]
  %v195 = vld [vmem:[%s70 + $0x170] sm:$0xff]
  %v196 = vld [vmem:[%s70 + $0x178] sm:$0xff]
  %v197 = vld [vmem:[%s70 + $0x180] sm:$0xff]
  %v198 = vld [vmem:[%s70 + $0x188] sm:$0xff]
  %v199 = vld [vmem:[%s70 + $0x190] sm:$0xff]
  %v200 = vld [vmem:[%s70 + $0x198] sm:$0xff]
  %v201 = vld [vmem:[%s70 + $0x1a0] sm:$0xff]
  %v202 = vld [vmem:[%s70 + $0x1a8] sm:$0xff]
  %v203 = vld [vmem:[%s70 + $0x1b0] sm:$0xff]
  %v204 = vld [vmem:[%s70 + $0x1b8] sm:$0xff]
  %v205 = vld [vmem:[%s70 + $0x1c0] sm:$0xff]
  %v206 = vld [vmem:[%s70 + $0x1c8] sm:$0xff]
  %v207 = vld [vmem:[%s70 + $0x1d0] sm:$0xff]
  %v208 = vld [vmem:[%s70 + $0x1d8] sm:$0xff]
  %v209 = vld [vmem:[%s70 + $0x1e0] sm:$0xff]
  %v210 = vld [vmem:[%s70 + $0x1e8] sm:$0xff]
  %v211 = vld [vmem:[%s70 + $0x1f0] sm:$0xff]
  %v212 = vld [vmem:[%s70 + $0x1f8] sm:$0xff]
  %v213 = vsub.f32 %v85, %v149
  %v214 = vsub.f32 %v86, %v150
  %v215 = vsub.f32 %v87, %v151
  %v216 = vsub.f32 %v88, %v152
  %v217 = vsub.f32 %v89, %v153
  %v218 = vsub.f32 %v90, %v154
  %v219 = vsub.f32 %v91, %v155
  %v220 = vsub.f32 %v92, %v156
  %v221 = vsub.f32 %v93, %v157
  %v222 = vsub.f32 %v94, %v158
  %v223 = vsub.f32 %v95, %v159
  %v224 = vsub.f32 %v96, %v160
  %v225 = vsub.f32 %v97, %v161
  %v226 = vsub.f32 %v98, %v162
  %v227 = vsub.f32 %v99, %v163
  %v228 = vsub.f32 %v100, %v164
  %v229 = vsub.f32 %v101, %v165
  %v230 = vsub.f32 %v102, %v166
  %v231 = vsub.f32 %v103, %v167
  %v232 = vsub.f32 %v104, %v168
  %v233 = vsub.f32 %v105, %v169
  %v234 = vsub.f32 %v106, %v170
  %v235 = vsub.f32 %v107, %v171
  %v236 = vsub.f32 %v108, %v172
  %v237 = vsub.f32 %v109, %v173
  %v238 = vsub.f32 %v110, %v174
  %v239 = vsub.f32 %v111, %v175
  %v240 = vsub.f32 %v112, %v176
  %v241 = vsub.f32 %v113, %v177
  %v242 = vsub.f32 %v114, %v178
  %v243 = vsub.f32 %v115, %v179
  %v244 = vsub.f32 %v116, %v180
  %v245 = vsub.f32 %v117, %v181
  %v246 = vsub.f32 %v118, %v182
  %v247 = vsub.f32 %v119, %v183
  %v248 = vsub.f32 %v120, %v184
  %v249 = vsub.f32 %v121, %v185
  %v250 = vsub.f32 %v122, %v186
  %v251 = vsub.f32 %v123, %v187
  %v252 = vsub.f32 %v124, %v188
  %v253 = vsub.f32 %v125, %v189
  %v254 = vsub.f32 %v126, %v190
  %v255 = vsub.f32 %v127, %v191
  %v256 = vsub.f32 %v128, %v192
  %v257 = vsub.f32 %v129, %v193
  %v258 = vsub.f32 %v130, %v194
  %v259 = vsub.f32 %v131, %v195
  %v260 = vsub.f32 %v132, %v196
  %v261 = vsub.f32 %v133, %v197
  %v262 = vsub.f32 %v134, %v198
  %v263 = vsub.f32 %v135, %v199
  %v264 = vsub.f32 %v136, %v200
  %v265 = vsub.f32 %v137, %v201
  %v266 = vsub.f32 %v138, %v202
  %v267 = vsub.f32 %v139, %v203
  %v268 = vsub.f32 %v140, %v204
  %v269 = vsub.f32 %v141, %v205
  %v270 = vsub.f32 %v142, %v206
  %v271 = vsub.f32 %v143, %v207
  %v272 = vsub.f32 %v144, %v208
  %v273 = vsub.f32 %v145, %v209
  %v274 = vsub.f32 %v146, %v210
  %v275 = vsub.f32 %v147, %v211
  %v276 = vsub.f32 %v148, %v212
  %v277 = vmul.f32 %v213, %v213
  %v278 = vmul.f32 %v214, %v214
  %v279 = vmul.f32 %v215, %v215
  %v280 = vmul.f32 %v216, %v216
  %v281 = vmul.f32 %v217, %v217
  %v282 = vmul.f32 %v218, %v218
  %v283 = vmul.f32 %v219, %v219
  %v284 = vmul.f32 %v220, %v220
  %v285 = vmul.f32 %v221, %v221
  %v286 = vmul.f32 %v222, %v222
  %v287 = vmul.f32 %v223, %v223
  %v288 = vmul.f32 %v224, %v224
  %v289 = vmul.f32 %v225, %v225
  %v290 = vmul.f32 %v226, %v226
  %v291 = vmul.f32 %v227, %v227
  %v292 = vmul.f32 %v228, %v228
  %v293 = vmul.f32 %v229, %v229
  %v294 = vmul.f32 %v230, %v230
  %v295 = vmul.f32 %v231, %v231
  %v296 = vmul.f32 %v232, %v232
  %v297 = vmul.f32 %v233, %v233
  %v298 = vmul.f32 %v234, %v234
  %v299 = vmul.f32 %v235, %v235
  %v300 = vmul.f32 %v236, %v236
  %v301 = vmul.f32 %v237, %v237
  %v302 = vmul.f32 %v238, %v238
  %v303 = vmul.f32 %v239, %v239
  %v304 = vmul.f32 %v240, %v240
  %v305 = vmul.f32 %v241, %v241
  %v306 = vmul.f32 %v242, %v242
  %v307 = vmul.f32 %v243, %v243
  %v308 = vmul.f32 %v244, %v244
  %v309 = vmul.f32 %v245, %v245
  %v310 = vmul.f32 %v246, %v246
  %v311 = vmul.f32 %v247, %v247
  %v312 = vmul.f32 %v248, %v248
  %v313 = vmul.f32 %v249, %v249
  %v314 = vmul.f32 %v250, %v250
  %v315 = vmul.f32 %v251, %v251
  %v316 = vmul.f32 %v252, %v252
  %v317 = vmul.f32 %v253, %v253
  %v318 = vmul.f32 %v254, %v254
  %v319 = vmul.f32 %v255, %v255
  %v320 = vmul.f32 %v256, %v256
  %v321 = vmul.f32 %v257, %v257
  %v322 = vmul.f32 %v258, %v258
  %v323 = vmul.f32 %v259, %v259
  %v324 = vmul.f32 %v260, %v260
  %v325 = vmul.f32 %v261, %v261
  %v326 = vmul.f32 %v262, %v262
  %v327 = vmul.f32 %v263, %v263
  %v328 = vmul.f32 %v264, %v264
  %v329 = vmul.f32 %v265, %v265
  %v330 = vmul.f32 %v266, %v266
  %v331 = vmul.f32 %v267, %v267
  %v332 = vmul.f32 %v268, %v268
  %v333 = vmul.f32 %v269, %v269
  %v334 = vmul.f32 %v270, %v270
  %v335 = vmul.f32 %v271, %v271
  %v336 = vmul.f32 %v272, %v272
  %v337 = vmul.f32 %v273, %v273
  %v338 = vmul.f32 %v274, %v274
  %v339 = vmul.f32 %v275, %v275
  %v340 = vmul.f32 %v276, %v276
  %s341 = sadd.s32 %s84, 512
  %p342 = scmp.le.s32.totalorder %s341, 16
  // Predicated region
  $region14: #{distance_loss.1} parent=0 // pred_check
    %p343 = pneg %p342
  $region15: #{distance_loss.1} parent=0 // pred_check_branch
    %345 = sbr.rel (%p343) target = $region17
  $region16: #{distance_loss.1} parent=0 // pred_region
    %v346 = vld [vmem:[#allocation2] sm:$0xff]
    %v347 = vld [vmem:[#allocation2 + $0x8] sm:$0xff]
    %v348 = vld [vmem:[#allocation2 + $0x10] sm:$0xff]
    %v349 = vld [vmem:[#allocation2 + $0x18] sm:$0xff]
    %v350 = vadd.f32 %v277, %v281
    %v351 = vadd.f32 %v350, %v285
    %v352 = vadd.f32 %v351, %v289
    %v353 = vadd.f32 %v352, %v293
    %v354 = vadd.f32 %v353, %v297
    %v355 = vadd.f32 %v354, %v301
    %v356 = vadd.f32 %v355, %v305
    %v357 = vadd.f32 %v356, %v309
    %v358 = vadd.f32 %v357, %v313
    %v359 = vadd.f32 %v358, %v317
    %v360 = vadd.f32 %v359, %v321
    %v361 = vadd.f32 %v360, %v325
    %v362 = vadd.f32 %v361, %v329
    %v363 = vadd.f32 %v362, %v333
    %v364 = vadd.f32 %v363, %v337
    %v365 = vadd.f32 %v278, %v282
    %v366 = vadd.f32 %v365, %v286
    %v367 = vadd.f32 %v366, %v290
    %v368 = vadd.f32 %v367, %v294
    %v369 = vadd.f32 %v368, %v298
    %v370 = vadd.f32 %v369, %v302
    %v371 = vadd.f32 %v370, %v306
    %v372 = vadd.f32 %v371, %v310
    %v373 = vadd.f32 %v372, %v314
    %v374 = vadd.f32 %v373, %v318
    %v375 = vadd.f32 %v374, %v322
    %v376 = vadd.f32 %v375, %v326
    %v377 = vadd.f32 %v376, %v330
    %v378 = vadd.f32 %v377, %v334
    %v379 = vadd.f32 %v378, %v338
    %v380 = vadd.f32 %v279, %v283
    %v381 = vadd.f32 %v380, %v287
    %v382 = vadd.f32 %v381, %v291
    %v383 = vadd.f32 %v382, %v295
    %v384 = vadd.f32 %v383, %v299
    %v385 = vadd.f32 %v384, %v303
    %v386 = vadd.f32 %v385, %v307
    %v387 = vadd.f32 %v386, %v311
    %v388 = vadd.f32 %v387, %v315
    %v389 = vadd.f32 %v388, %v319
    %v390 = vadd.f32 %v389, %v323
    %v391 = vadd.f32 %v390, %v327
    %v392 = vadd.f32 %v391, %v331
    %v393 = vadd.f32 %v392, %v335
    %v394 = vadd.f32 %v393, %v339
    %v395 = vadd.f32 %v280, %v284
    %v396 = vadd.f32 %v395, %v288
    %v397 = vadd.f32 %v396, %v292
    %v398 = vadd.f32 %v397, %v296
    %v399 = vadd.f32 %v398, %v300
    %v400 = vadd.f32 %v399, %v304
    %v401 = vadd.f32 %v400, %v308
    %v402 = vadd.f32 %v401, %v312
    %v403 = vadd.f32 %v402, %v316
    %v404 = vadd.f32 %v403, %v320
    %v405 = vadd.f32 %v404, %v324
    %v406 = vadd.f32 %v405, %v328
    %v407 = vadd.f32 %v406, %v332
    %v408 = vadd.f32 %v407, %v336
    %v409 = vadd.f32 %v408, %v340
    %v410 = vadd.f32 %v346, %v364
    %v411 = vadd.f32 %v347, %v379
    %v412 = vadd.f32 %v348, %v394
    %v413 = vadd.f32 %v349, %v409
    %414 = vst [vmem:[#allocation2] sm:$0xff] %v410
    %415 = vst [vmem:[#allocation2 + $0x8] sm:$0xff] %v411
    %416 = vst [vmem:[#allocation2 + $0x10] sm:$0xff] %v412
    %417 = vst [vmem:[#allocation2 + $0x18] sm:$0xff] %v413
  $region17: #{distance_loss.1} parent=0 // pred_fallthru
    _
  %p418 = scmp.gt.s32.totalorder %s341, 16
  // Predicated region
  $region18: #{distance_loss.1} parent=0 // pred_check
    %p419 = pneg %p418
  $region19: #{distance_loss.1} parent=0 // pred_check_branch
    %421 = sbr.rel (%p419) target = $region21
  $region20: #{distance_loss.1} parent=0 // pred_region
    %v422 = vlaneseq
    %v423 = vshrl.u32 %v422, 7
    %v424 = vadd.s32 %v423, 8
    %v425 = vadd.s32 %v423, 16
    %v426 = vadd.s32 %v423, 24
    %v427 = vadd.s32 %v423, 32
    %v428 = vadd.s32 %v423, 40
    %v429 = vadd.s32 %v423, 48
    %v430 = vadd.s32 %v423, 56
    %v431 = vadd.s32 %v423, 64
    %v432 = vadd.s32 %v423, 72
    %v433 = vadd.s32 %v423, 80
    %v434 = vadd.s32 %v423, 88
    %v435 = vadd.s32 %v423, 96
    %v436 = vadd.s32 %v423, 104
    %v437 = vadd.s32 %v423, 112
    %v438 = vadd.s32 %v423, 120
    %v439 = vadd.s32 %v423, 128
    %v440 = vadd.s32 %v423, 136
    %v441 = vadd.s32 %v423, 144
    %v442 = vadd.s32 %v423, 152
    %v443 = vadd.s32 %v423, 160
    %v444 = vadd.s32 %v423, 168
    %v445 = vadd.s32 %v423, 176
    %v446 = vadd.s32 %v423, 184
    %v447 = vadd.s32 %v423, 192
    %v448 = vadd.s32 %v423, 200
    %v449 = vadd.s32 %v423, 208
    %v450 = vadd.s32 %v423, 216
    %v451 = vadd.s32 %v423, 224
    %v452 = vadd.s32 %v423, 232
    %v453 = vadd.s32 %v423, 240
    %v454 = vadd.s32 %v423, 248
    %v455 = vadd.s32 %v423, 256
    %v456 = vadd.s32 %v423, 264
    %v457 = vadd.s32 %v423, 272
    %v458 = vadd.s32 %v423, 280
    %v459 = vadd.s32 %v423, 288
    %v460 = vadd.s32 %v423, 296
    %v461 = vadd.s32 %v423, 304
    %v462 = vadd.s32 %v423, 312
    %v463 = vadd.s32 %v423, 320
    %v464 = vadd.s32 %v423, 328
    %v465 = vadd.s32 %v423, 336
    %v466 = vadd.s32 %v423, 344
    %v467 = vadd.s32 %v423, 352
    %v468 = vadd.s32 %v423, 360
    %v469 = vadd.s32 %v423, 368
    %v470 = vadd.s32 %v423, 376
    %v471 = vadd.s32 %v423, 384
    %v472 = vadd.s32 %v423, 392
    %v473 = vadd.s32 %v423, 400
    %v474 = vadd.s32 %v423, 408
    %v475 = vadd.s32 %v423, 416
    %v476 = vadd.s32 %v423, 424
    %v477 = vadd.s32 %v423, 432
    %v478 = vadd.s32 %v423, 440
    %v479 = vadd.s32 %v423, 448
    %v480 = vadd.s32 %v423, 456
    %v481 = vadd.s32 %v423, 464
    %v482 = vadd.s32 %v423, 472
    %v483 = vadd.s32 %v423, 480
    %v484 = vadd.s32 %v423, 488
    %v485 = vadd.s32 %v423, 496
    %v486 = vadd.s32 %v423, 504
    %v487 = vstv %s84
    %v488 = vadd.s32 %v487, %v423
    %v489 = vadd.s32 %v487, %v424
    %v490 = vadd.s32 %v487, %v425
    %v491 = vadd.s32 %v487, %v426
    %v492 = vadd.s32 %v487, %v427
    %v493 = vadd.s32 %v487, %v428
    %v494 = vadd.s32 %v487, %v429
    %v495 = vadd.s32 %v487, %v430
    %v496 = vadd.s32 %v487, %v431
    %v497 = vadd.s32 %v487, %v432
    %v498 = vadd.s32 %v487, %v433
    %v499 = vadd.s32 %v487, %v434
    %v500 = vadd.s32 %v487, %v435
    %v501 = vadd.s32 %v487, %v436
    %v502 = vadd.s32 %v487, %v437
    %v503 = vadd.s32 %v487, %v438
    %v504 = vadd.s32 %v487, %v439
    %v505 = vadd.s32 %v487, %v440
    %v506 = vadd.s32 %v487, %v441
    %v507 = vadd.s32 %v487, %v442
    %v508 = vadd.s32 %v487, %v443
    %v509 = vadd.s32 %v487, %v444
    %v510 = vadd.s32 %v487, %v445
    %v511 = vadd.s32 %v487, %v446
    %v512 = vadd.s32 %v487, %v447
    %v513 = vadd.s32 %v487, %v448
    %v514 = vadd.s32 %v487, %v449
    %v515 = vadd.s32 %v487, %v450
    %v516 = vadd.s32 %v487, %v451
    %v517 = vadd.s32 %v487, %v452
    %v518 = vadd.s32 %v487, %v453
    %v519 = vadd.s32 %v487, %v454
    %v520 = vadd.s32 %v487, %v455
    %v521 = vadd.s32 %v487, %v456
    %v522 = vadd.s32 %v487, %v457
    %v523 = vadd.s32 %v487, %v458
    %v524 = vadd.s32 %v487, %v459
    %v525 = vadd.s32 %v487, %v460
    %v526 = vadd.s32 %v487, %v461
    %v527 = vadd.s32 %v487, %v462
    %v528 = vadd.s32 %v487, %v463
    %v529 = vadd.s32 %v487, %v464
    %v530 = vadd.s32 %v487, %v465
    %v531 = vadd.s32 %v487, %v466
    %v532 = vadd.s32 %v487, %v467
    %v533 = vadd.s32 %v487, %v468
    %v534 = vadd.s32 %v487, %v469
    %v535 = vadd.s32 %v487, %v470
    %v536 = vadd.s32 %v487, %v471
    %v537 = vadd.s32 %v487, %v472
    %v538 = vadd.s32 %v487, %v473
    %v539 = vadd.s32 %v487, %v474
    %v540 = vadd.s32 %v487, %v475
    %v541 = vadd.s32 %v487, %v476
    %v542 = vadd.s32 %v487, %v477
    %v543 = vadd.s32 %v487, %v478
    %v544 = vadd.s32 %v487, %v479
    %v545 = vadd.s32 %v487, %v480
    %v546 = vadd.s32 %v487, %v481
    %v547 = vadd.s32 %v487, %v482
    %v548 = vadd.s32 %v487, %v483
    %v549 = vadd.s32 %v487, %v484
    %v550 = vadd.s32 %v487, %v485
    %v551 = vadd.s32 %v487, %v486
    %vm552 = vcmp.lt.s32.totalorder %v488, 16
    %vm553 = vcmp.lt.s32.totalorder %v489, 16
    %vm554 = vcmp.lt.s32.totalorder %v490, 16
    %vm555 = vcmp.lt.s32.totalorder %v491, 16
    %vm556 = vcmp.lt.s32.totalorder %v492, 16
    %vm557 = vcmp.lt.s32.totalorder %v493, 16
    %vm558 = vcmp.lt.s32.totalorder %v494, 16
    %vm559 = vcmp.lt.s32.totalorder %v495, 16
    %vm560 = vcmp.lt.s32.totalorder %v496, 16
    %vm561 = vcmp.lt.s32.totalorder %v497, 16
    %vm562 = vcmp.lt.s32.totalorder %v498, 16
    %vm563 = vcmp.lt.s32.totalorder %v499, 16
    %vm564 = vcmp.lt.s32.totalorder %v500, 16
    %vm565 = vcmp.lt.s32.totalorder %v501, 16
    %vm566 = vcmp.lt.s32.totalorder %v502, 16
    %vm567 = vcmp.lt.s32.totalorder %v503, 16
    %vm568 = vcmp.lt.s32.totalorder %v504, 16
    %vm569 = vcmp.lt.s32.totalorder %v505, 16
    %vm570 = vcmp.lt.s32.totalorder %v506, 16
    %vm571 = vcmp.lt.s32.totalorder %v507, 16
    %vm572 = vcmp.lt.s32.totalorder %v508, 16
    %vm573 = vcmp.lt.s32.totalorder %v509, 16
    %vm574 = vcmp.lt.s32.totalorder %v510, 16
    %vm575 = vcmp.lt.s32.totalorder %v511, 16
    %vm576 = vcmp.lt.s32.totalorder %v512, 16
    %vm577 = vcmp.lt.s32.totalorder %v513, 16
    %vm578 = vcmp.lt.s32.totalorder %v514, 16
    %vm579 = vcmp.lt.s32.totalorder %v515, 16
    %vm580 = vcmp.lt.s32.totalorder %v516, 16
    %vm581 = vcmp.lt.s32.totalorder %v517, 16
    %vm582 = vcmp.lt.s32.totalorder %v518, 16
    %vm583 = vcmp.lt.s32.totalorder %v519, 16
    %vm584 = vcmp.lt.s32.totalorder %v520, 16
    %vm585 = vcmp.lt.s32.totalorder %v521, 16
    %vm586 = vcmp.lt.s32.totalorder %v522, 16
    %vm587 = vcmp.lt.s32.totalorder %v523, 16
    %vm588 = vcmp.lt.s32.totalorder %v524, 16
    %vm589 = vcmp.lt.s32.totalorder %v525, 16
    %vm590 = vcmp.lt.s32.totalorder %v526, 16
    %vm591 = vcmp.lt.s32.totalorder %v527, 16
    %vm592 = vcmp.lt.s32.totalorder %v528, 16
    %vm593 = vcmp.lt.s32.totalorder %v529, 16
    %vm594 = vcmp.lt.s32.totalorder %v530, 16
    %vm595 = vcmp.lt.s32.totalorder %v531, 16
    %vm596 = vcmp.lt.s32.totalorder %v532, 16
    %vm597 = vcmp.lt.s32.totalorder %v533, 16
    %vm598 = vcmp.lt.s32.totalorder %v534, 16
    %vm599 = vcmp.lt.s32.totalorder %v535, 16
    %vm600 = vcmp.lt.s32.totalorder %v536, 16
    %vm601 = vcmp.lt.s32.totalorder %v537, 16
    %vm602 = vcmp.lt.s32.totalorder %v538, 16
    %vm603 = vcmp.lt.s32.totalorder %v539, 16
    %vm604 = vcmp.lt.s32.totalorder %v540, 16
    %vm605 = vcmp.lt.s32.totalorder %v541, 16
    %vm606 = vcmp.lt.s32.totalorder %v542, 16
    %vm607 = vcmp.lt.s32.totalorder %v543, 16
    %vm608 = vcmp.lt.s32.totalorder %v544, 16
    %vm609 = vcmp.lt.s32.totalorder %v545, 16
    %vm610 = vcmp.lt.s32.totalorder %v546, 16
    %vm611 = vcmp.lt.s32.totalorder %v547, 16
    %vm612 = vcmp.lt.s32.totalorder %v548, 16
    %vm613 = vcmp.lt.s32.totalorder %v549, 16
    %vm614 = vcmp.lt.s32.totalorder %v550, 16
    %vm615 = vcmp.lt.s32.totalorder %v551, 16
    %v616 = vsel %vm552, %v277, 0.0
    %v617 = vsel %vm553, %v278, 0.0
    %v618 = vsel %vm554, %v279, 0.0
    %v619 = vsel %vm555, %v280, 0.0
    %v620 = vsel %vm556, %v281, 0.0
    %v621 = vsel %vm557, %v282, 0.0
    %v622 = vsel %vm558, %v283, 0.0
    %v623 = vsel %vm559, %v284, 0.0
    %v624 = vsel %vm560, %v285, 0.0
    %v625 = vsel %vm561, %v286, 0.0
    %v626 = vsel %vm562, %v287, 0.0
    %v627 = vsel %vm563, %v288, 0.0
    %v628 = vsel %vm564, %v289, 0.0
    %v629 = vsel %vm565, %v290, 0.0
    %v630 = vsel %vm566, %v291, 0.0
    %v631 = vsel %vm567, %v292, 0.0
    %v632 = vsel %vm568, %v293, 0.0
    %v633 = vsel %vm569, %v294, 0.0
    %v634 = vsel %vm570, %v295, 0.0
    %v635 = vsel %vm571, %v296, 0.0
    %v636 = vsel %vm572, %v297, 0.0
    %v637 = vsel %vm573, %v298, 0.0
    %v638 = vsel %vm574, %v299, 0.0
    %v639 = vsel %vm575, %v300, 0.0
    %v640 = vsel %vm576, %v301, 0.0
    %v641 = vsel %vm577, %v302, 0.0
    %v642 = vsel %vm578, %v303, 0.0
    %v643 = vsel %vm579, %v304, 0.0
    %v644 = vsel %vm580, %v305, 0.0
    %v645 = vsel %vm581, %v306, 0.0
    %v646 = vsel %vm582, %v307, 0.0
    %v647 = vsel %vm583, %v308, 0.0
    %v648 = vsel %vm584, %v309, 0.0
    %v649 = vsel %vm585, %v310, 0.0
    %v650 = vsel %vm586, %v311, 0.0
    %v651 = vsel %vm587, %v312, 0.0
    %v652 = vsel %vm588, %v313, 0.0
    %v653 = vsel %vm589, %v314, 0.0
    %v654 = vsel %vm590, %v315, 0.0
    %v655 = vsel %vm591, %v316, 0.0
    %v656 = vsel %vm592, %v317, 0.0
    %v657 = vsel %vm593, %v318, 0.0
    %v658 = vsel %vm594, %v319, 0.0
    %v659 = vsel %vm595, %v320, 0.0
    %v660 = vsel %vm596, %v321, 0.0
    %v661 = vsel %vm597, %v322, 0.0
    %v662 = vsel %vm598, %v323, 0.0
    %v663 = vsel %vm599, %v324, 0.0
    %v664 = vsel %vm600, %v325, 0.0
    %v665 = vsel %vm601, %v326, 0.0
    %v666 = vsel %vm602, %v327, 0.0
    %v667 = vsel %vm603, %v328, 0.0
    %v668 = vsel %vm604, %v329, 0.0
    %v669 = vsel %vm605, %v330, 0.0
    %v670 = vsel %vm606, %v331, 0.0
    %v671 = vsel %vm607, %v332, 0.0
    %v672 = vsel %vm608, %v333, 0.0
    %v673 = vsel %vm609, %v334, 0.0
    %v674 = vsel %vm610, %v335, 0.0
    %v675 = vsel %vm611, %v336, 0.0
    %v676 = vsel %vm612, %v337, 0.0
    %v677 = vsel %vm613, %v338, 0.0
    %v678 = vsel %vm614, %v339, 0.0
    %v679 = vsel %vm615, %v340, 0.0
    %v680 = vld [vmem:[#allocation2] sm:$0xff]
    %v681 = vld [vmem:[#allocation2 + $0x8] sm:$0xff]
    %v682 = vld [vmem:[#allocation2 + $0x10] sm:$0xff]
    %v683 = vld [vmem:[#allocation2 + $0x18] sm:$0xff]
    %v684 = vadd.f32 %v616, %v620
    %v685 = vadd.f32 %v684, %v624
    %v686 = vadd.f32 %v685, %v628
    %v687 = vadd.f32 %v686, %v632
    %v688 = vadd.f32 %v687, %v636
    %v689 = vadd.f32 %v688, %v640
    %v690 = vadd.f32 %v689, %v644
    %v691 = vadd.f32 %v690, %v648
    %v692 = vadd.f32 %v691, %v652
    %v693 = vadd.f32 %v692, %v656
    %v694 = vadd.f32 %v693, %v660
    %v695 = vadd.f32 %v694, %v664
    %v696 = vadd.f32 %v695, %v668
    %v697 = vadd.f32 %v696, %v672
    %v698 = vadd.f32 %v697, %v676
    %v699 = vadd.f32 %v617, %v621
    %v700 = vadd.f32 %v699, %v625
    %v701 = vadd.f32 %v700, %v629
    %v702 = vadd.f32 %v701, %v633
    %v703 = vadd.f32 %v702, %v637
    %v704 = vadd.f32 %v703, %v641
    %v705 = vadd.f32 %v704, %v645
    %v706 = vadd.f32 %v705, %v649
    %v707 = vadd.f32 %v706, %v653
    %v708 = vadd.f32 %v707, %v657
    %v709 = vadd.f32 %v708, %v661
    %v710 = vadd.f32 %v709, %v665
    %v711 = vadd.f32 %v710, %v669
    %v712 = vadd.f32 %v711, %v673
    %v713 = vadd.f32 %v712, %v677
    %v714 = vadd.f32 %v618, %v622
    %v715 = vadd.f32 %v714, %v626
    %v716 = vadd.f32 %v715, %v630
    %v717 = vadd.f32 %v716, %v634
    %v718 = vadd.f32 %v717, %v638
    %v719 = vadd.f32 %v718, %v642
    %v720 = vadd.f32 %v719, %v646
    %v721 = vadd.f32 %v720, %v650
    %v722 = vadd.f32 %v721, %v654
    %v723 = vadd.f32 %v722, %v658
    %v724 = vadd.f32 %v723, %v662
    %v725 = vadd.f32 %v724, %v666
    %v726 = vadd.f32 %v725, %v670
    %v727 = vadd.f32 %v726, %v674
    %v728 = vadd.f32 %v727, %v678
    %v729 = vadd.f32 %v619, %v623
    %v730 = vadd.f32 %v729, %v627
    %v731 = vadd.f32 %v730, %v631
    %v732 = vadd.f32 %v731, %v635
    %v733 = vadd.f32 %v732, %v639
    %v734 = vadd.f32 %v733, %v643
    %v735 = vadd.f32 %v734, %v647
    %v736 = vadd.f32 %v735, %v651
    %v737 = vadd.f32 %v736, %v655
    %v738 = vadd.f32 %v737, %v659
    %v739 = vadd.f32 %v738, %v663
    %v740 = vadd.f32 %v739, %v667
    %v741 = vadd.f32 %v740, %v671
    %v742 = vadd.f32 %v741, %v675
    %v743 = vadd.f32 %v742, %v679
    %v744 = vadd.f32 %v680, %v698
    %v745 = vadd.f32 %v681, %v713
    %v746 = vadd.f32 %v682, %v728
    %v747 = vadd.f32 %v683, %v743
    %748 = vst [vmem:[#allocation2] sm:$0xff] %v744
    %749 = vst [vmem:[#allocation2 + $0x8] sm:$0xff] %v745
    %750 = vst [vmem:[#allocation2 + $0x10] sm:$0xff] %v746
    %751 = vst [vmem:[#allocation2 + $0x18] sm:$0xff] %v747
  $region21: #{distance_loss.1} parent=0 // pred_fallthru
    _
  // Predicated region
  $region22: #{distance_loss.1} parent=0 // pred_check
    %p752 = pneg %p75
  $region23: #{distance_loss.1} parent=0 // pred_check_branch
    %754 = sbr.rel (%p752) target = $region25
  $region24: #{distance_loss.1} parent=0 // pred_region
    %v755 = vld [vmem:[#allocation2] sm:$0xff]
    %v756 = vld [vmem:[#allocation2 + $0x8] sm:$0xff]
    %v757 = vld [vmem:[#allocation2 + $0x10] sm:$0xff]
    %v758 = vld [vmem:[#allocation2 + $0x18] sm:$0xff]
    %759 = vst [vmem:[%s2] sm:$0xff] %v755
    %760 = vst [vmem:[%s2 + $0x8] sm:$0xff] %v756
    %761 = vst [vmem:[%s2 + $0x10] sm:$0xff] %v757
    %762 = vst [vmem:[%s2 + $0x18] sm:$0xff] %v758
  $region25: #{distance_loss.1} parent=0 // pred_fallthru
    _
  // Predicated region
  $region26: #{distance_loss.1} parent=0 // pred_check
    _
  $region27: #{distance_loss.1} parent=0 // pred_check_branch
    %764 = sbr.rel (0) target = $region29
  $region28: #{distance_loss.1} parent=0 // pred_region
    _
  $region29: #{distance_loss.1} parent=0 // pred_fallthru
    _
  // Predicated region
  $region30: #{distance_loss.1} parent=0 // pred_check
    _
  $region31: #{distance_loss.1} parent=0 // pred_check_branch
    %766 = sbr.rel (0) target = $region33
  $region32: #{distance_loss.1} parent=0 // pred_region
    _
  $region33: #{distance_loss.1} parent=0 // pred_fallthru
    _

</llo_original>
